<compile_context>
chip_gen: v5e
topology: v5e:2x2
jax: 0.10.0
libtpu: 0.0.40
codegen_flags: <defaults>
</compile_context>

<pallas_src>
import functools

import jax
import jax.numpy as jnp
from jax.experimental import pallas as pl
from jax.experimental.pallas import tpu as pltpu

EPS = 1e-5
LANES = 128


def _round_up(x, m):
    return (x + m - 1) // m * m


# ----------------------------- Pallas kernels ------------------------------ #

def _conv_bn_relu_kernel(p_ref, w_ref, b_ref, o_ref):
    """out = relu(patches @ w_scaled + bias). BN scale pre-folded into w."""
    acc = jnp.dot(p_ref[...], w_ref[...], preferred_element_type=jnp.float32)
    o_ref[...] = jnp.maximum(acc + b_ref[...], 0.0).astype(o_ref.dtype)


def _conv_bn_relu_proj_kernel(p_ref, w_ref, b_ref, bsc_ref, o_ref, sc_ref, *, cp):
    """One MXU dot producing conv1(+bn1+relu) AND the fused 1x1 projection
    shortcut(+bn_sc). The projection weight occupies output columns [cp, 2cp)
    of the combined weight (nonzero only on the centre-tap rows, which are
    exactly the 1x1-conv input columns of the im2col patches)."""
    acc = jnp.dot(p_ref[...], w_ref[...], preferred_element_type=jnp.float32)
    o_ref[...] = jnp.maximum(acc[:, :cp] + b_ref[...], 0.0).astype(o_ref.dtype)
    sc_ref[...] = (acc[:, cp:] + bsc_ref[...]).astype(sc_ref.dtype)


def _conv_bn_add_relu_kernel(p_ref, w_ref, b_ref, sc_ref, o_ref):
    """out = relu(patches @ w_scaled + bias + shortcut)."""
    acc = jnp.dot(p_ref[...], w_ref[...], preferred_element_type=jnp.float32)
    o_ref[...] = jnp.maximum(acc + b_ref[...] + sc_ref[...], 0.0).astype(o_ref.dtype)


_COMPILER_PARAMS = pltpu.CompilerParams(
    dimension_semantics=("parallel",),          # megacore-shard the M tiles
    vmem_limit_bytes=48 * 1024 * 1024,          # safe on v7x's 64 MiB VMEM
)


def _tiled_matmul_call(kernel, patches, weight, vec_inputs, shortcut, out_shapes, tm):
    """Grid over M row-tiles; weight/bias stay resident, rows are pipelined."""
    m_pad, _ = patches.shape
    grid = (m_pad // tm,)

    def row_spec(width):
        return pl.BlockSpec((tm, width), lambda i: (i, 0))

    def full_spec(arr):
        return pl.BlockSpec(arr.shape, lambda i: (0, 0))

    args = [patches, weight] + list(vec_inputs)
    in_specs = [row_spec(patches.shape[1]), full_spec(weight)]
    in_specs += [full_spec(v) for v in vec_inputs]
    if shortcut is not None:
        args.append(shortcut)
        in_specs.append(row_spec(shortcut.shape[1]))

    out_specs = [row_spec(s.shape[1]) for s in out_shapes]
    out_shape = list(out_shapes)
    if len(out_shape) == 1:
        out_specs, out_shape = out_specs[0], out_shape[0]

    return pl.pallas_call(
        kernel,
        grid=grid,
        in_specs=in_specs,
        out_specs=out_specs,
        out_shape=out_shape,
        compiler_params=_COMPILER_PARAMS,
    )(*args)


# ------------------------------ JAX glue code ------------------------------ #

def _im2col_3x3(x_nhwc, stride):
    """3x3, pad=1 im2col. Returns ((N*Ho*Wo, 9*C), Ho, Wo). k-order=(kh,kw,c)."""
    n, h, w, c = x_nhwc.shape
    xp = jnp.pad(x_nhwc, ((0, 0), (1, 1), (1, 1), (0, 0)))
    ho = (h + 2 - 3) // stride + 1
    wo = (w + 2 - 3) // stride + 1
    cols = []
    for dh in range(3):
        for dw in range(3):
            cols.append(xp[:, dh:dh + stride * (ho - 1) + 1:stride,
                           dw:dw + stride * (wo - 1) + 1:stride, :])
    p = jnp.concatenate(cols, axis=-1)
    return p.reshape(n * ho * wo, 9 * c), ho, wo


def _w3x3_to_mat(w_oihw):
    # (Cout, Cin, 3, 3) -> (9*Cin, Cout), row order (kh, kw, c_in).
    c_out = w_oihw.shape[0]
    return jnp.transpose(w_oihw, (2, 3, 1, 0)).reshape(-1, c_out)


def _bn_fold(gamma, beta, mean, var):
    scale = gamma / jnp.sqrt(var + EPS)
    bias = beta - mean * scale
    return scale, bias


def _pad_rows(a, m_pad):
    m = a.shape[0]
    if m == m_pad:
        return a
    return jnp.pad(a, ((0, m_pad - m), (0, 0)))


def _pad_vec(v, cp):
    out = jnp.zeros((1, cp), jnp.float32)
    return out.at[0, : v.shape[0]].set(v.astype(jnp.float32))


def _pick_tm(m):
    # Full tile when small (block == full dim is always legal); otherwise
    # 256-row pipelined tiles (sublane aligned for bf16 and f32).
    return _round_up(m, 16) if m <= 256 else 256


def init_basic_block_params(key, c_in, c_out, stride):
    ks = jax.random.split(key, 12)

    def bn_params(k):
        k1, k2, k3, k4 = jax.random.split(k, 4)
        return dict(
            gamma=1.0 + 0.1 * jax.random.normal(k1, (c_out,), jnp.float32),
            beta=0.1 * jax.random.normal(k2, (c_out,), jnp.float32),
            mean=0.1 * jax.random.normal(k3, (c_out,), jnp.float32),
            var=jax.random.uniform(k4, (c_out,), jnp.float32, 0.5, 1.5),
        )

    params = {
        "w1": 0.1 * jax.random.normal(ks[0], (c_out, c_in, 3, 3), jnp.float32),
        "bn1": bn_params(ks[1]),
        "w2": 0.1 * jax.random.normal(ks[2], (c_out, c_out, 3, 3), jnp.float32),
        "bn2": bn_params(ks[3]),
    }
    if stride != 1 or c_in != c_out:
        params["wsc"] = 0.1 * jax.random.normal(ks[4], (c_out, c_in, 1, 1), jnp.float32)
        params["bnsc"] = bn_params(ks[5])
    return params


def basic_block_forward(x_nchw, params, stride, c_in, c_out):
    """Pallas implementation of BasicBlock.forward (eval mode, dropout_rate=0)."""
    x = jnp.transpose(x_nchw, (0, 2, 3, 1)).astype(jnp.float32)   # NHWC
    n = x.shape[0]
    cp = _round_up(c_out, LANES)                                  # lane-dense channels
    has_proj = (stride != 1) or (c_in != c_out)

    # ---- conv1 + bn1 + relu  (shortcut projection fused in) ---------------- #
    p1, ho, wo = _im2col_3x3(x.astype(jnp.bfloat16), stride)      # (M, 9*c_in) bf16
    m = p1.shape[0]
    tm = _pick_tm(m)
    m_pad = _round_up(m, tm)
    p1 = _pad_rows(p1, m_pad)

    s1, b1 = _bn_fold(**params["bn1"])
    w1m = _w3x3_to_mat(params["w1"]) * s1[None, :]                # BN scale folded
    b1p = _pad_vec(b1, cp)
    k1 = w1m.shape[0]

    if has_proj:
        ssc, bsc = _bn_fold(**params["bnsc"])
        wscm = jnp.transpose(params["wsc"], (2, 3, 1, 0)).reshape(c_in, c_out) * ssc[None, :]
        # Combined weight: cols [0,cp) -> conv1 ; cols [cp,2cp) -> 1x1 projection
        # (only the centre-tap rows 4*c_in:5*c_in are nonzero there).
        w_comb = jnp.zeros((k1, 2 * cp), jnp.float32)
        w_comb = w_comb.at[:, :c_out].set(w1m)
        w_comb = w_comb.at[4 * c_in:5 * c_in, cp:cp + c_out].set(wscm)
        bscp = _pad_vec(bsc, cp)
        out1, sc = _tiled_matmul_call(
            functools.partial(_conv_bn_relu_proj_kernel, cp=cp),
            p1, w_comb.astype(jnp.bfloat16), [b1p, bscp], None,
            [jax.ShapeDtypeStruct((m_pad, cp), jnp.bfloat16),
             jax.ShapeDtypeStruct((m_pad, cp), jnp.float32)],
            tm)
    else:
        w1p = jnp.zeros((k1, cp), jnp.float32).at[:, :c_out].set(w1m)
        out1 = _tiled_matmul_call(
            _conv_bn_relu_kernel,
            p1, w1p.astype(jnp.bfloat16), [b1p], None,
            [jax.ShapeDtypeStruct((m_pad, cp), jnp.bfloat16)],
            tm)
        # Identity shortcut: x itself, laid out as the lane-dense (m_pad, cp) slab.
        sc = jnp.zeros((m_pad, cp), jnp.float32)
        sc = sc.at[:m, :c_out].set(x.reshape(m, c_out))

    # ---- conv2 + bn2 + residual add + relu --------------------------------- #
    out1_img = out1[:m, :c_out].reshape(n, ho, wo, c_out)          # bf16
    p2, _, _ = _im2col_3x3(out1_img, 1)                            # (M, 9*c_out) bf16
    p2 = _pad_rows(p2, m_pad)

    s2, b2 = _bn_fold(**params["bn2"])
    w2m = _w3x3_to_mat(params["w2"]) * s2[None, :]
    w2p = jnp.zeros((w2m.shape[0], cp), jnp.float32).at[:, :c_out].set(w2m)
    b2p = _pad_vec(b2, cp)

    out = _tiled_matmul_call(
        _conv_bn_add_relu_kernel,
        p2, w2p.astype(jnp.bfloat16), [b2p], sc,
        [jax.ShapeDtypeStruct((m_pad, cp), jnp.float32)],
        tm)

    out = out[:m, :c_out].reshape(n, ho, wo, c_out)
    return jnp.transpose(out, (0, 3, 1, 2))                        # back to NCHW


# ------------------------------- pure-JAX ref ------------------------------- #

def _ref_forward(x_nchw, params, stride, c_in, c_out):
    def conv(x, w, s, pad):
        return jax.lax.conv_general_dilated(
            x, w, (s, s), [(pad, pad), (pad, pad)],
            dimension_numbers=("NCHW", "OIHW", "NCHW"))

    def bn(x, p):
        scale = p["gamma"] / jnp.sqrt(p["var"] + EPS)
        bias = p["beta"] - p["mean"] * scale
        return x * scale[None, :, None, None] + bias[None, :, None, None]

    out = jax.nn.relu(bn(conv(x_nchw, params["w1"], stride, 1), params["bn1"]))
    out = bn(conv(out, params["w2"], 1, 1), params["bn2"])
    if stride != 1 or c_in != c_out:
        sc = bn(conv(x_nchw, params["wsc"], stride, 0), params["bnsc"])
    else:
        sc = x_nchw
    return jax.nn.relu(out + sc)


# ----------------------------------- main ----------------------------------- #

if __name__ == "__main__":
    key = jax.random.PRNGKey(0)
    kx, kp1, kp2 = jax.random.split(key, 3)

    fwd = jax.jit(basic_block_forward, static_argnums=(2, 3, 4))

    # Case 1: projection shortcut (stride=2, channel expansion 4 -> 8).
    x = jax.random.normal(kx, (2, 4, 16, 16), jnp.float32)
    params = init_basic_block_params(kp1, c_in=4, c_out=8, stride=2)
    out = jax.block_until_ready(fwd(x, params, 2, 4, 8))
    ref = jax.block_until_ready(_ref_forward(x, params, stride=2, c_in=4, c_out=8))
    assert out.shape == (2, 8, 8, 8), out.shape
    # bf16 matmul operands -> loosened tolerance vs the pure-f32 reference.
    assert jnp.allclose(out, ref, atol=3e-2, rtol=3e-2), float(jnp.max(jnp.abs(out - ref)))

    # Case 2: identity shortcut (stride=1, 4 -> 4).
    params_id = init_basic_block_params(kp2, c_in=4, c_out=4, stride=1)
    out_id = jax.block_until_ready(fwd(x, params_id, 1, 4, 4))
    ref_id = jax.block_until_ready(_ref_forward(x, params_id, stride=1, c_in=4, c_out=4))
    assert out_id.shape == (2, 4, 16, 16), out_id.shape
    assert jnp.allclose(out_id, ref_id, atol=3e-2, rtol=3e-2), float(jnp.max(jnp.abs(out_id - ref_id)))

    print("KERNEL_OK")
</pallas_src>

<mosaic_0001>
module attributes {stable_mosaic.version = 11 : i64} {
  func.func @_conv_bn_relu_proj_kernel(%arg0: i32, %arg1: memref<128x36xbf16, #tpu.memory_space<vmem>>, %arg2: memref<36x256xbf16, #tpu.memory_space<vmem>>, %arg3: memref<1x128xf32, #tpu.memory_space<vmem>>, %arg4: memref<1x128xf32, #tpu.memory_space<vmem>>, %arg5: memref<128x128xbf16, #tpu.memory_space<vmem>>, %arg6: memref<128x128xf32, #tpu.memory_space<vmem>>) attributes {dimension_semantics = [#tpu.dimension_semantics<parallel>], iteration_bounds = array<i64: 1>, scalar_prefetch = 0 : i64, scratch_operands = 0 : i64, tpu.core_type = #tpu.core_type<tc>, window_params = [{transform_indices = @transform_0, window_bounds = array<i64: 128, 36>}, {pipeline_mode = #tpu.pipeline_mode<synchronous>, transform_indices = @transform_1, window_bounds = array<i64: 36, 256>}, {pipeline_mode = #tpu.pipeline_mode<synchronous>, transform_indices = @transform_2, window_bounds = array<i64: 1, 128>}, {pipeline_mode = #tpu.pipeline_mode<synchronous>, transform_indices = @transform_3, window_bounds = array<i64: 1, 128>}, {transform_indices = @transform_4, window_bounds = array<i64: 128, 128>}, {transform_indices = @transform_5, window_bounds = array<i64: 128, 128>}]} {
    %c0 = arith.constant 0 : index
    %c0_0 = arith.constant 0 : index
    %0 = vector.load %arg1[%c0, %c0_0] : memref<128x36xbf16, #tpu.memory_space<vmem>>, vector<128x36xbf16>
    %c0_1 = arith.constant 0 : index
    %c0_2 = arith.constant 0 : index
    %1 = vector.load %arg2[%c0_1, %c0_2] : memref<36x256xbf16, #tpu.memory_space<vmem>>, vector<36x256xbf16>
    %cst = arith.constant dense<0.000000e+00> : vector<128x256xf32>
    %2 = tpu.matmul %0, %1, %cst {dimension_numbers = #tpu.dot_dimension_numbers<[1], [0], [0], [1], [0, 0, 1, 1], [], []>} : vector<128x36xbf16>, vector<36x256xbf16>, vector<128x256xf32> -> vector<128x256xf32>
    %3 = vector.extract_strided_slice %2 {offsets = [0, 0], sizes = [128, 128], strides = [1, 1]} : vector<128x256xf32> to vector<128x128xf32>
    %c0_3 = arith.constant 0 : index
    %c0_4 = arith.constant 0 : index
    %4 = vector.load %arg3[%c0_3, %c0_4] : memref<1x128xf32, #tpu.memory_space<vmem>>, vector<1x128xf32>
    %5 = vector.broadcast %4 : vector<1x128xf32> to vector<128x128xf32>
    %6 = arith.addf %3, %5 : vector<128x128xf32>
    %cst_5 = arith.constant 0.000000e+00 : f32
    %7 = vector.broadcast %cst_5 : f32 to vector<128x128xf32>
    %8 = arith.maximumf %6, %7 : vector<128x128xf32>
    %9 = arith.truncf %8 : vector<128x128xf32> to vector<128x128xbf16>
    %c0_6 = arith.constant 0 : index
    %c0_7 = arith.constant 0 : index
    %10 = vector.load %arg5[%c0_6, %c0_7] : memref<128x128xbf16, #tpu.memory_space<vmem>>, vector<128x128xbf16>
    tpu.vector_store %arg5[%c0_6, %c0_7], %9 {strides = array<i32>} : memref<128x128xbf16, #tpu.memory_space<vmem>>, vector<128x128xbf16>,
    %11 = vector.extract_strided_slice %2 {offsets = [0, 128], sizes = [128, 128], strides = [1, 1]} : vector<128x256xf32> to vector<128x128xf32>
    %c0_8 = arith.constant 0 : index
    %c0_9 = arith.constant 0 : index
    %12 = vector.load %arg4[%c0_8, %c0_9] : memref<1x128xf32, #tpu.memory_space<vmem>>, vector<1x128xf32>
    %13 = vector.broadcast %12 : vector<1x128xf32> to vector<128x128xf32>
    %14 = arith.addf %11, %13 : vector<128x128xf32>
    %c0_10 = arith.constant 0 : index
    %c0_11 = arith.constant 0 : index
    %15 = vector.load %arg6[%c0_10, %c0_11] : memref<128x128xf32, #tpu.memory_space<vmem>>, vector<128x128xf32>
    tpu.vector_store %arg6[%c0_10, %c0_11], %14 {strides = array<i32>} : memref<128x128xf32, #tpu.memory_space<vmem>>, vector<128x128xf32>,
    return
  }
  func.func @transform_0(%arg0: i32) -> (i32, i32) {
    %c0_i32 = arith.constant 0 : i32
    %c0_i32_0 = arith.constant 0 : i32
    return %arg0, %c0_i32 : i32, i32
  }
  func.func @transform_1(%arg0: i32) -> (i32, i32) {
    %c0_i32 = arith.constant 0 : i32
    %c0_i32_0 = arith.constant 0 : i32
    %c0_i32_1 = arith.constant 0 : i32
    return %c0_i32, %c0_i32_0 : i32, i32
  }
  func.func @transform_2(%arg0: i32) -> (i32, i32) {
    %c0_i32 = arith.constant 0 : i32
    %c0_i32_0 = arith.constant 0 : i32
    %c0_i32_1 = arith.constant 0 : i32
    return %c0_i32, %c0_i32_0 : i32, i32
  }
  func.func @transform_3(%arg0: i32) -> (i32, i32) {
    %c0_i32 = arith.constant 0 : i32
    %c0_i32_0 = arith.constant 0 : i32
    %c0_i32_1 = arith.constant 0 : i32
    return %c0_i32, %c0_i32_0 : i32, i32
  }
  func.func @transform_4(%arg0: i32) -> (i32, i32) {
    %c0_i32 = arith.constant 0 : i32
    %c0_i32_0 = arith.constant 0 : i32
    return %arg0, %c0_i32 : i32, i32
  }
  func.func @transform_5(%arg0: i32) -> (i32, i32) {
    %c0_i32 = arith.constant 0 : i32
    %c0_i32_0 = arith.constant 0 : i32
    return %arg0, %c0_i32 : i32, i32
  }
}

module attributes {stable_mosaic.version = 11 : i64} {
  func.func @_conv_bn_add_relu_kernel(%arg0: i32, %arg1: memref<128x72xbf16, #tpu.memory_space<vmem>>, %arg2: memref<72x128xbf16, #tpu.memory_space<vmem>>, %arg3: memref<1x128xf32, #tpu.memory_space<vmem>>, %arg4: memref<128x128xf32, #tpu.memory_space<vmem>>, %arg5: memref<128x128xf32, #tpu.memory_space<vmem>>) attributes {dimension_semantics = [#tpu.dimension_semantics<parallel>], iteration_bounds = array<i64: 1>, scalar_prefetch = 0 : i64, scratch_operands = 0 : i64, tpu.core_type = #tpu.core_type<tc>, window_params = [{transform_indices = @transform_0, window_bounds = array<i64: 128, 72>}, {pipeline_mode = #tpu.pipeline_mode<synchronous>, transform_indices = @transform_1, window_bounds = array<i64: 72, 128>}, {pipeline_mode = #tpu.pipeline_mode<synchronous>, transform_indices = @transform_2, window_bounds = array<i64: 1, 128>}, {transform_indices = @transform_3, window_bounds = array<i64: 128, 128>}, {transform_indices = @transform_4, window_bounds = array<i64: 128, 128>}]} {
    %c0 = arith.constant 0 : index
    %c0_0 = arith.constant 0 : index
    %0 = vector.load %arg1[%c0, %c0_0] : memref<128x72xbf16, #tpu.memory_space<vmem>>, vector<128x72xbf16>
    %c0_1 = arith.constant 0 : index
    %c0_2 = arith.constant 0 : index
    %1 = vector.load %arg2[%c0_1, %c0_2] : memref<72x128xbf16, #tpu.memory_space<vmem>>, vector<72x128xbf16>
    %cst = arith.constant dense<0.000000e+00> : vector<128x128xf32>
    %2 = tpu.matmul %0, %1, %cst {dimension_numbers = #tpu.dot_dimension_numbers<[1], [0], [0], [1], [0, 0, 1, 1], [], []>} : vector<128x72xbf16>, vector<72x128xbf16>, vector<128x128xf32> -> vector<128x128xf32>
    %c0_3 = arith.constant 0 : index
    %c0_4 = arith.constant 0 : index
    %3 = vector.load %arg3[%c0_3, %c0_4] : memref<1x128xf32, #tpu.memory_space<vmem>>, vector<1x128xf32>
    %4 = vector.broadcast %3 : vector<1x128xf32> to vector<128x128xf32>
    %5 = arith.addf %2, %4 : vector<128x128xf32>
    %c0_5 = arith.constant 0 : index
    %c0_6 = arith.constant 0 : index
    %6 = vector.load %arg4[%c0_5, %c0_6] : memref<128x128xf32, #tpu.memory_space<vmem>>, vector<128x128xf32>
    %7 = arith.addf %5, %6 : vector<128x128xf32>
    %cst_7 = arith.constant 0.000000e+00 : f32
    %8 = vector.broadcast %cst_7 : f32 to vector<128x128xf32>
    %9 = arith.maximumf %7, %8 : vector<128x128xf32>
    %c0_8 = arith.constant 0 : index
    %c0_9 = arith.constant 0 : index
    %10 = vector.load %arg5[%c0_8, %c0_9] : memref<128x128xf32, #tpu.memory_space<vmem>>, vector<128x128xf32>
    tpu.vector_store %arg5[%c0_8, %c0_9], %9 {strides = array<i32>} : memref<128x128xf32, #tpu.memory_space<vmem>>, vector<128x128xf32>,
    return
  }
  func.func @transform_0(%arg0: i32) -> (i32, i32) {
    %c0_i32 = arith.constant 0 : i32
    %c0_i32_0 = arith.constant 0 : i32
    return %arg0, %c0_i32 : i32, i32
  }
  func.func @transform_1(%arg0: i32) -> (i32, i32) {
    %c0_i32 = arith.constant 0 : i32
    %c0_i32_0 = arith.constant 0 : i32
    %c0_i32_1 = arith.constant 0 : i32
    return %c0_i32, %c0_i32_0 : i32, i32
  }
  func.func @transform_2(%arg0: i32) -> (i32, i32) {
    %c0_i32 = arith.constant 0 : i32
    %c0_i32_0 = arith.constant 0 : i32
    %c0_i32_1 = arith.constant 0 : i32
    return %c0_i32, %c0_i32_0 : i32, i32
  }
  func.func @transform_3(%arg0: i32) -> (i32, i32) {
    %c0_i32 = arith.constant 0 : i32
    %c0_i32_0 = arith.constant 0 : i32
    return %arg0, %c0_i32 : i32, i32
  }
  func.func @transform_4(%arg0: i32) -> (i32, i32) {
    %c0_i32 = arith.constant 0 : i32
    %c0_i32_0 = arith.constant 0 : i32
    return %arg0, %c0_i32 : i32, i32
  }
}

</mosaic_0001>

<llo_original>
// kernel: basic_block_forward.2
$region0: #{basic_block_forward.2}
  #allocation0 [shape = 'u32[]', space=smem, size = 0x4, offset = 0x4, fixed_abs, tag = 'smem constant byte address 0x4 - core index']
  #allocation1 [shape = 'u32[72,128]{1,0:T(1,128)}', space=vmem, size = 0x9000, scoped, tag = 'internal scratch']
  %s0 = inlined_call_operand.vmem [shape: bf16[128,36], index: 0, kind: input, shape index: {}]
  %s1 = inlined_call_operand.vmem [shape: bf16[36,256], index: 1, kind: input, shape index: {}]
  %s2 = inlined_call_operand.vmem [shape: f32[1,128], index: 2, kind: input, shape index: {}]
  %s3 = inlined_call_operand.vmem [shape: f32[1,128], index: 3, kind: input, shape index: {}]
  %s4 = inlined_call_operand.vmem [shape: bf16[128,128], index: 4, kind: output, shape index: {0}]
  %s5 = inlined_call_operand.vmem [shape: f32[128,128], index: 5, kind: output, shape index: {1}]
  %6 = xla_tuple %s4, %s5
  %s7 = sld [smem:[#allocation0]]
  $region34: #{basic_block_forward.2} parent=0
    _
  %s9 = ssub.s32 1, %s7
  %s10 = scalar_select 0, %s9, %s7
  // Predicated region
  $region2: #{basic_block_forward.2} parent=0 // pred_check
    _
  $region3: #{basic_block_forward.2} parent=0 // pred_check_branch
    %12 = sbr.rel (0) target = $region5
  $region4: #{basic_block_forward.2} parent=0 // pred_region
    _
  $region5: #{basic_block_forward.2} parent=0 // pred_fallthru
    _
  // Predicated region
  $region6: #{basic_block_forward.2} parent=0 // pred_check
    _
  $region7: #{basic_block_forward.2} parent=0 // pred_check_branch
    %14 = sbr.rel (0) target = $region9
  $region8: #{basic_block_forward.2} parent=0 // pred_region
    _
  $region9: #{basic_block_forward.2} parent=0 // pred_fallthru
    _
  // Predicated region
  $region10: #{basic_block_forward.2} parent=0 // pred_check
    _
  $region11: #{basic_block_forward.2} parent=0 // pred_check_branch
    %16 = sbr.rel (0) target = $region13
  $region12: #{basic_block_forward.2} parent=0 // pred_region
    _
  $region13: #{basic_block_forward.2} parent=0 // pred_fallthru
    _
  // Predicated region
  $region14: #{basic_block_forward.2} parent=0 // pred_check
    _
  $region15: #{basic_block_forward.2} parent=0 // pred_check_branch
    %18 = sbr.rel (0) target = $region17
  $region16: #{basic_block_forward.2} parent=0 // pred_region
    _
  $region17: #{basic_block_forward.2} parent=0 // pred_fallthru
    _
  %v20 = vld [vmem:[%s0] sm:$0xf]
  %v21 = vld [vmem:[%s0 + $0x4] sm:$0xf]
  %v22 = vld [vmem:[%s0 + $0x8] sm:$0xf]
  %v23 = vld [vmem:[%s0 + $0xc] sm:$0xf]
  %v24 = vld [vmem:[%s0 + $0x10] sm:$0xf]
  %v25 = vld [vmem:[%s0 + $0x14] sm:$0xf]
  %v26 = vld [vmem:[%s0 + $0x18] sm:$0xf]
  %v27 = vld [vmem:[%s0 + $0x1c] sm:$0xf]
  %v28 = vld [vmem:[%s0 + $0x20] sm:$0xf]
  %v29 = vld [vmem:[%s0 + $0x24] sm:$0xf]
  %v30 = vld [vmem:[%s0 + $0x28] sm:$0xf]
  %v31 = vld [vmem:[%s0 + $0x2c] sm:$0xf]
  %v32 = vld [vmem:[%s0 + $0x30] sm:$0xf]
  %v33 = vld [vmem:[%s0 + $0x34] sm:$0xf]
  %v34 = vld [vmem:[%s0 + $0x38] sm:$0xf]
  %v35 = vld [vmem:[%s0 + $0x3c] sm:$0xf]
  %v36 = vld [vmem:[%s1] sm:$0xff]
  %v37 = vld [vmem:[%s1 + $0x8] sm:$0xff]
  %v38 = vld [vmem:[%s1 + $0x10] sm:$0xff]
  %v39 = vld [vmem:[%s1 + $0x18] sm:$0xff]
  %v40 = vld [vmem:[%s1 + $0x20] sm:$0x33]
  %v57 = vunpack.c.l.b16 %v20
  %v58 = vunpack.c.l.b16 %v21
  %v59 = vunpack.c.l.b16 %v22
  %v60 = vunpack.c.l.b16 %v23
  %v61 = vunpack.c.l.b16 %v24
  %v62 = vunpack.c.l.b16 %v25
  %v63 = vunpack.c.l.b16 %v26
  %v64 = vunpack.c.l.b16 %v27
  %v65 = vunpack.c.l.b16 %v28
  %v66 = vunpack.c.l.b16 %v29
  %v67 = vunpack.c.l.b16 %v30
  %v68 = vunpack.c.l.b16 %v31
  %v69 = vunpack.c.l.b16 %v32
  %v70 = vunpack.c.l.b16 %v33
  %v71 = vunpack.c.l.b16 %v34
  %v72 = vunpack.c.l.b16 %v35
  %v73 = vpack.c.b16 %v58, %v57
  %v74 = vpack.c.b16 %v60, %v59
  %v75 = vpack.c.b16 %v62, %v61
  %v76 = vpack.c.b16 %v64, %v63
  %v77 = vpack.c.b16 %v66, %v65
  %v78 = vpack.c.b16 %v68, %v67
  %v79 = vpack.c.b16 %v70, %v69
  %v80 = vpack.c.b16 %v72, %v71
  %v86 = vunpack.c.l.b16 %v36
  %v87 = vunpack.c.h.b16 %v36
  %v88 = vunpack.c.l.b16 %v37
  %v89 = vunpack.c.h.b16 %v37
  %v90 = vunpack.c.l.b16 %v38
  %v91 = vunpack.c.h.b16 %v38
  %v92 = vunpack.c.l.b16 %v39
  %v93 = vunpack.c.h.b16 %v39
  %v94 = vunpack.c.l.b16 %v40
  %v95 = vunpack.c.h.b16 %v40
  %v96 = vpack.c.b16 %v88, %v86
  %v97 = vpack.c.b16 %v89, %v87
  %v98 = vpack.c.b16 %v92, %v90
  %v99 = vpack.c.b16 %v93, %v91
  %v100 = vpack.c.b16 %v94, %v94
  %v101 = vpack.c.b16 %v95, %v95
  %vm106 = vcmask 293888
  %v108 = vsel %vm106, %v73, 0
  %v111 = vsel %vm106, %v74, 0
  %v114 = vsel %vm106, %v75, 0
  %v117 = vsel %vm106, %v76, 0
  %v120 = vsel %vm106, %v77, 0
  %v123 = vsel %vm106, %v78, 0
  %v126 = vsel %vm106, %v79, 0
  %v129 = vsel %vm106, %v80, 0
  %vm131 = vcmask 1041408
  %v133 = vsel %vm131, %v100, 0
  %v136 = vsel %vm131, %v101, 0
  %138 = vmatpush.bf16.msra.mxu0 0
  %139 = vmatpush.bf16.msra.mxu0 0
  %140 = vmatpush.bf16.msra.mxu0 0
  %141 = vmatpush.bf16.msra.mxu0 0
  %142 = vmatpush.bf16.msra.mxu0 0
  %143 = vmatpush.bf16.msra.mxu0 %v133
  %144 = vmatpush.bf16.msra.mxu0 %v98
  %145 = vmatpush.bf16.msra.mxu0 %v96
  %146 = vmatmul.bf16.gmra.mxu0 %v108
  %v147 = vpop.f32.mrf.mxu0
  %v148 = vadd.f32 0.0, %v147
  %v149 = vpop.f32.mrf.mxu0
  %v150 = vadd.f32 0.0, %v149
  %151 = vmatmul.bf16.gmra.mxu0 %v111
  %v152 = vpop.f32.mrf.mxu0
  %v153 = vadd.f32 0.0, %v152
  %v154 = vpop.f32.mrf.mxu0
  %v155 = vadd.f32 0.0, %v154
  %156 = vmatmul.bf16.gmra.mxu0 %v114
  %v157 = vpop.f32.mrf.mxu0
  %v158 = vadd.f32 0.0, %v157
  %v159 = vpop.f32.mrf.mxu0
  %v160 = vadd.f32 0.0, %v159
  %161 = vmatmul.bf16.gmra.mxu0 %v117
  %v162 = vpop.f32.mrf.mxu0
  %v163 = vadd.f32 0.0, %v162
  %v164 = vpop.f32.mrf.mxu0
  %v165 = vadd.f32 0.0, %v164
  %166 = vmatmul.bf16.gmra.mxu0 %v120
  %v167 = vpop.f32.mrf.mxu0
  %v168 = vadd.f32 0.0, %v167
  %v169 = vpop.f32.mrf.mxu0
  %v170 = vadd.f32 0.0, %v169
  %171 = vmatmul.bf16.gmra.mxu0 %v123
  %v172 = vpop.f32.mrf.mxu0
  %v173 = vadd.f32 0.0, %v172
  %v174 = vpop.f32.mrf.mxu0
  %v175 = vadd.f32 0.0, %v174
  %176 = vmatmul.bf16.gmra.mxu0 %v126
  %v177 = vpop.f32.mrf.mxu0
  %v178 = vadd.f32 0.0, %v177
  %v179 = vpop.f32.mrf.mxu0
  %v180 = vadd.f32 0.0, %v179
  %181 = vmatmul.bf16.gmra.mxu0 %v129
  %v182 = vpop.f32.mrf.mxu0
  %v183 = vadd.f32 0.0, %v182
  %v184 = vpop.f32.mrf.mxu0
  %v185 = vadd.f32 0.0, %v184
  %186 = vdwg.mxu0
  %187 = vmatpush.bf16.msra.mxu0 0
  %188 = vmatpush.bf16.msra.mxu0 0
  %189 = vmatpush.bf16.msra.mxu0 0
  %190 = vmatpush.bf16.msra.mxu0 0
  %191 = vmatpush.bf16.msra.mxu0 0
  %192 = vmatpush.bf16.msra.mxu0 %v136
  %193 = vmatpush.bf16.msra.mxu0 %v99
  %194 = vmatpush.bf16.msra.mxu0 %v97
  %195 = vmatmul.bf16.gmra.mxu0 %v108
  %v196 = vpop.f32.mrf.mxu0
  %v197 = vadd.f32 0.0, %v196
  %v198 = vpop.f32.mrf.mxu0
  %v199 = vadd.f32 0.0, %v198
  %200 = vmatmul.bf16.gmra.mxu0 %v111
  %v201 = vpop.f32.mrf.mxu0
  %v202 = vadd.f32 0.0, %v201
  %v203 = vpop.f32.mrf.mxu0
  %v204 = vadd.f32 0.0, %v203
  %205 = vmatmul.bf16.gmra.mxu0 %v114
  %v206 = vpop.f32.mrf.mxu0
  %v207 = vadd.f32 0.0, %v206
  %v208 = vpop.f32.mrf.mxu0
  %v209 = vadd.f32 0.0, %v208
  %210 = vmatmul.bf16.gmra.mxu0 %v117
  %v211 = vpop.f32.mrf.mxu0
  %v212 = vadd.f32 0.0, %v211
  %v213 = vpop.f32.mrf.mxu0
  %v214 = vadd.f32 0.0, %v213
  %215 = vmatmul.bf16.gmra.mxu0 %v120
  %v216 = vpop.f32.mrf.mxu0
  %v217 = vadd.f32 0.0, %v216
  %v218 = vpop.f32.mrf.mxu0
  %v219 = vadd.f32 0.0, %v218
  %220 = vmatmul.bf16.gmra.mxu0 %v123
  %v221 = vpop.f32.mrf.mxu0
  %v222 = vadd.f32 0.0, %v221
  %v223 = vpop.f32.mrf.mxu0
  %v224 = vadd.f32 0.0, %v223
  %225 = vmatmul.bf16.gmra.mxu0 %v126
  %v226 = vpop.f32.mrf.mxu0
  %v227 = vadd.f32 0.0, %v226
  %v228 = vpop.f32.mrf.mxu0
  %v229 = vadd.f32 0.0, %v228
  %230 = vmatmul.bf16.gmra.mxu0 %v129
  %v231 = vpop.f32.mrf.mxu0
  %v232 = vadd.f32 0.0, %v231
  %v233 = vpop.f32.mrf.mxu0
  %v234 = vadd.f32 0.0, %v233
  %235 = vdwg.mxu0
  %v236 = vld [vmem:[%s2] sm:$0x1]
  %v238 = vperm.slane %v236, 0
  %v240 = vadd.f32 %v148, %v238
  %v241 = vadd.f32 %v150, %v238
  %v242 = vadd.f32 %v153, %v238
  %v243 = vadd.f32 %v155, %v238
  %v244 = vadd.f32 %v158, %v238
  %v245 = vadd.f32 %v160, %v238
  %v246 = vadd.f32 %v163, %v238
  %v247 = vadd.f32 %v165, %v238
  %v248 = vadd.f32 %v168, %v238
  %v249 = vadd.f32 %v170, %v238
  %v250 = vadd.f32 %v173, %v238
  %v251 = vadd.f32 %v175, %v238
  %v252 = vadd.f32 %v178, %v238
  %v253 = vadd.f32 %v180, %v238
  %v254 = vadd.f32 %v183, %v238
  %v255 = vadd.f32 %v185, %v238
  %v256 = vmax.f32 %v240, 0.0
  %v257 = vmax.f32 %v241, 0.0
  %v258 = vmax.f32 %v242, 0.0
  %v259 = vmax.f32 %v243, 0.0
  %v260 = vmax.f32 %v244, 0.0
  %v261 = vmax.f32 %v245, 0.0
  %v262 = vmax.f32 %v246, 0.0
  %v263 = vmax.f32 %v247, 0.0
  %v264 = vmax.f32 %v248, 0.0
  %v265 = vmax.f32 %v249, 0.0
  %v266 = vmax.f32 %v250, 0.0
  %v267 = vmax.f32 %v251, 0.0
  %v268 = vmax.f32 %v252, 0.0
  %v269 = vmax.f32 %v253, 0.0
  %v270 = vmax.f32 %v254, 0.0
  %v271 = vmax.f32 %v255, 0.0
  %v272 = vpack.c.bf16 %v256, %v256
  %v273 = vpack.c.bf16 %v257, %v257
  %v274 = vpack.c.bf16 %v258, %v258
  %v275 = vpack.c.bf16 %v259, %v259
  %v276 = vpack.c.bf16 %v260, %v260
  %v277 = vpack.c.bf16 %v261, %v261
  %v278 = vpack.c.bf16 %v262, %v262
  %v279 = vpack.c.bf16 %v263, %v263
  %v280 = vpack.c.bf16 %v264, %v264
  %v281 = vpack.c.bf16 %v265, %v265
  %v282 = vpack.c.bf16 %v266, %v266
  %v283 = vpack.c.bf16 %v267, %v267
  %v284 = vpack.c.bf16 %v268, %v268
  %v285 = vpack.c.bf16 %v269, %v269
  %v286 = vpack.c.bf16 %v270, %v270
  %v287 = vpack.c.bf16 %v271, %v271
  %288 = vst [vmem:[%s4] sm:$0xf] %v272
  %289 = vst [vmem:[%s4 + $0x4] sm:$0xf] %v273
  %290 = vst [vmem:[%s4 + $0x8] sm:$0xf] %v274
  %291 = vst [vmem:[%s4 + $0xc] sm:$0xf] %v275
  %292 = vst [vmem:[%s4 + $0x10] sm:$0xf] %v276
  %293 = vst [vmem:[%s4 + $0x14] sm:$0xf] %v277
  %294 = vst [vmem:[%s4 + $0x18] sm:$0xf] %v278
  %295 = vst [vmem:[%s4 + $0x1c] sm:$0xf] %v279
  %296 = vst [vmem:[%s4 + $0x20] sm:$0xf] %v280
  %297 = vst [vmem:[%s4 + $0x24] sm:$0xf] %v281
  %298 = vst [vmem:[%s4 + $0x28] sm:$0xf] %v282
  %299 = vst [vmem:[%s4 + $0x2c] sm:$0xf] %v283
  %300 = vst [vmem:[%s4 + $0x30] sm:$0xf] %v284
  %301 = vst [vmem:[%s4 + $0x34] sm:$0xf] %v285
  %302 = vst [vmem:[%s4 + $0x38] sm:$0xf] %v286
  %303 = vst [vmem:[%s4 + $0x3c] sm:$0xf] %v287
  %v304 = vld [vmem:[%s3] sm:$0x1]
  %v306 = vperm.slane %v304, 0
  %v308 = vadd.f32 %v197, %v306
  %v309 = vadd.f32 %v199, %v306
  %v310 = vadd.f32 %v202, %v306
  %v311 = vadd.f32 %v204, %v306
  %v312 = vadd.f32 %v207, %v306
  %v313 = vadd.f32 %v209, %v306
  %v314 = vadd.f32 %v212, %v306
  %v315 = vadd.f32 %v214, %v306
  %v316 = vadd.f32 %v217, %v306
  %v317 = vadd.f32 %v219, %v306
  %v318 = vadd.f32 %v222, %v306
  %v319 = vadd.f32 %v224, %v306
  %v320 = vadd.f32 %v227, %v306
  %v321 = vadd.f32 %v229, %v306
  %v322 = vadd.f32 %v232, %v306
  %v323 = vadd.f32 %v234, %v306
  %324 = vst [vmem:[%s5] sm:$0xff] %v308
  %325 = vst [vmem:[%s5 + $0x8] sm:$0xff] %v309
  %326 = vst [vmem:[%s5 + $0x10] sm:$0xff] %v310
  %327 = vst [vmem:[%s5 + $0x18] sm:$0xff] %v311
  %328 = vst [vmem:[%s5 + $0x20] sm:$0xff] %v312
  %329 = vst [vmem:[%s5 + $0x28] sm:$0xff] %v313
  %330 = vst [vmem:[%s5 + $0x30] sm:$0xff] %v314
  %331 = vst [vmem:[%s5 + $0x38] sm:$0xff] %v315
  %332 = vst [vmem:[%s5 + $0x40] sm:$0xff] %v316
  %333 = vst [vmem:[%s5 + $0x48] sm:$0xff] %v317
  %334 = vst [vmem:[%s5 + $0x50] sm:$0xff] %v318
  %335 = vst [vmem:[%s5 + $0x58] sm:$0xff] %v319
  %336 = vst [vmem:[%s5 + $0x60] sm:$0xff] %v320
  %337 = vst [vmem:[%s5 + $0x68] sm:$0xff] %v321
  %338 = vst [vmem:[%s5 + $0x70] sm:$0xff] %v322
  %339 = vst [vmem:[%s5 + $0x78] sm:$0xff] %v323
  // Predicated region
  $region18: #{basic_block_forward.2} parent=0 // pred_check
    _
  $region19: #{basic_block_forward.2} parent=0 // pred_check_branch
    %341 = sbr.rel (0) target = $region21
  $region20: #{basic_block_forward.2} parent=0 // pred_region
    _
  $region21: #{basic_block_forward.2} parent=0 // pred_fallthru
    _
  // Predicated region
  $region22: #{basic_block_forward.2} parent=0 // pred_check
    _
  $region23: #{basic_block_forward.2} parent=0 // pred_check_branch
    %343 = sbr.rel (0) target = $region25
  $region24: #{basic_block_forward.2} parent=0 // pred_region
    _
  $region25: #{basic_block_forward.2} parent=0 // pred_fallthru
    _
  // Predicated region
  $region26: #{basic_block_forward.2} parent=0 // pred_check
    _
  $region27: #{basic_block_forward.2} parent=0 // pred_check_branch
    %345 = sbr.rel (0) target = $region29
  $region28: #{basic_block_forward.2} parent=0 // pred_region
    _
  $region29: #{basic_block_forward.2} parent=0 // pred_fallthru
    _
  // Predicated region
  $region30: #{basic_block_forward.2} parent=0 // pred_check
    _
  $region31: #{basic_block_forward.2} parent=0 // pred_check_branch
    %347 = sbr.rel (0) target = $region33
  $region32: #{basic_block_forward.2} parent=0 // pred_region
    _
  $region33: #{basic_block_forward.2} parent=0 // pred_fallthru
    _

// kernel: basic_block_forward.3
$region0: #{basic_block_forward.3}
  #allocation0 [shape = 'u32[]', space=smem, size = 0x4, offset = 0x4, fixed_abs, tag = 'smem constant byte address 0x4 - core index']
  #allocation1 [shape = 'u32[72,128]{1,0:T(1,128)}', space=vmem, size = 0x9000, scoped, tag = 'internal scratch']
  %s0 = inlined_call_operand.vmem [shape: bf16[128,72], index: 0, kind: input, shape index: {}]
  %s1 = inlined_call_operand.vmem [shape: bf16[72,128], index: 1, kind: input, shape index: {}]
  %s2 = inlined_call_operand.vmem [shape: f32[1,128], index: 2, kind: input, shape index: {}]
  %s3 = inlined_call_operand.vmem [shape: f32[128,128], index: 3, kind: input, shape index: {}]
  %s4 = inlined_call_operand.vmem [shape: f32[128,128], index: 4, kind: output, shape index: {}]
  %s5 = sld [smem:[#allocation0]]
  $region26: #{basic_block_forward.3} parent=0
    _
  %s7 = ssub.s32 1, %s5
  %s8 = scalar_select 0, %s7, %s5
  // Predicated region
  $region2: #{basic_block_forward.3} parent=0 // pred_check
    _
  $region3: #{basic_block_forward.3} parent=0 // pred_check_branch
    %10 = sbr.rel (0) target = $region5
  $region4: #{basic_block_forward.3} parent=0 // pred_region
    _
  $region5: #{basic_block_forward.3} parent=0 // pred_fallthru
    _
  // Predicated region
  $region6: #{basic_block_forward.3} parent=0 // pred_check
    _
  $region7: #{basic_block_forward.3} parent=0 // pred_check_branch
    %12 = sbr.rel (0) target = $region9
  $region8: #{basic_block_forward.3} parent=0 // pred_region
    _
  $region9: #{basic_block_forward.3} parent=0 // pred_fallthru
    _
  // Predicated region
  $region10: #{basic_block_forward.3} parent=0 // pred_check
    _
  $region11: #{basic_block_forward.3} parent=0 // pred_check_branch
    %14 = sbr.rel (0) target = $region13
  $region12: #{basic_block_forward.3} parent=0 // pred_region
    _
  $region13: #{basic_block_forward.3} parent=0 // pred_fallthru
    _
  // Predicated region
  $region14: #{basic_block_forward.3} parent=0 // pred_check
    _
  $region15: #{basic_block_forward.3} parent=0 // pred_check_branch
    %16 = sbr.rel (0) target = $region17
  $region16: #{basic_block_forward.3} parent=0 // pred_region
    _
  $region17: #{basic_block_forward.3} parent=0 // pred_fallthru
    _
  %v18 = vld [vmem:[%s0] sm:$0xf]
  %v19 = vld [vmem:[%s0 + $0x4] sm:$0xf]
  %v20 = vld [vmem:[%s0 + $0x8] sm:$0xf]
  %v21 = vld [vmem:[%s0 + $0xc] sm:$0xf]
  %v22 = vld [vmem:[%s0 + $0x10] sm:$0xf]
  %v23 = vld [vmem:[%s0 + $0x14] sm:$0xf]
  %v24 = vld [vmem:[%s0 + $0x18] sm:$0xf]
  %v25 = vld [vmem:[%s0 + $0x1c] sm:$0xf]
  %v26 = vld [vmem:[%s0 + $0x20] sm:$0xf]
  %v27 = vld [vmem:[%s0 + $0x24] sm:$0xf]
  %v28 = vld [vmem:[%s0 + $0x28] sm:$0xf]
  %v29 = vld [vmem:[%s0 + $0x2c] sm:$0xf]
  %v30 = vld [vmem:[%s0 + $0x30] sm:$0xf]
  %v31 = vld [vmem:[%s0 + $0x34] sm:$0xf]
  %v32 = vld [vmem:[%s0 + $0x38] sm:$0xf]
  %v33 = vld [vmem:[%s0 + $0x3c] sm:$0xf]
  %v34 = vld [vmem:[%s1] sm:$0xf]
  %v35 = vld [vmem:[%s1 + $0x4] sm:$0xf]
  %v36 = vld [vmem:[%s1 + $0x8] sm:$0xf]
  %v37 = vld [vmem:[%s1 + $0xc] sm:$0xf]
  %v38 = vld [vmem:[%s1 + $0x10] sm:$0xf]
  %v39 = vld [vmem:[%s1 + $0x14] sm:$0xf]
  %v40 = vld [vmem:[%s1 + $0x18] sm:$0xf]
  %v41 = vld [vmem:[%s1 + $0x1c] sm:$0xf]
  %v42 = vld [vmem:[%s1 + $0x20] sm:$0xf]
  %v43 = vld [vmem:[%s2] sm:$0x1]
  %v45 = vperm.slane %v43, 0
  %v63 = vunpack.c.l.b16 %v18
  %v64 = vunpack.c.l.b16 %v19
  %v65 = vunpack.c.l.b16 %v20
  %v66 = vunpack.c.l.b16 %v21
  %v67 = vunpack.c.l.b16 %v22
  %v68 = vunpack.c.l.b16 %v23
  %v69 = vunpack.c.l.b16 %v24
  %v70 = vunpack.c.l.b16 %v25
  %v71 = vunpack.c.l.b16 %v26
  %v72 = vunpack.c.l.b16 %v27
  %v73 = vunpack.c.l.b16 %v28
  %v74 = vunpack.c.l.b16 %v29
  %v75 = vunpack.c.l.b16 %v30
  %v76 = vunpack.c.l.b16 %v31
  %v77 = vunpack.c.l.b16 %v32
  %v78 = vunpack.c.l.b16 %v33
  %v79 = vpack.c.b16 %v64, %v63
  %v80 = vpack.c.b16 %v66, %v65
  %v81 = vpack.c.b16 %v68, %v67
  %v82 = vpack.c.b16 %v70, %v69
  %v83 = vpack.c.b16 %v72, %v71
  %v84 = vpack.c.b16 %v74, %v73
  %v85 = vpack.c.b16 %v76, %v75
  %v86 = vpack.c.b16 %v78, %v77
  %v96 = vunpack.c.l.b16 %v34
  %v97 = vunpack.c.l.b16 %v35
  %v98 = vunpack.c.l.b16 %v36
  %v99 = vunpack.c.l.b16 %v37
  %v100 = vunpack.c.l.b16 %v38
  %v101 = vunpack.c.l.b16 %v39
  %v102 = vunpack.c.l.b16 %v40
  %v103 = vunpack.c.l.b16 %v41
  %v104 = vunpack.c.l.b16 %v42
  %v105 = vpack.c.b16 %v97, %v96
  %v106 = vpack.c.b16 %v99, %v98
  %v107 = vpack.c.b16 %v101, %v100
  %v108 = vpack.c.b16 %v103, %v102
  %v109 = vpack.c.b16 %v104, %v104
  %vm114 = vcmask 588800
  %v116 = vsel %vm114, %v79, 0
  %v119 = vsel %vm114, %v80, 0
  %v122 = vsel %vm114, %v81, 0
  %v125 = vsel %vm114, %v82, 0
  %v128 = vsel %vm114, %v83, 0
  %v131 = vsel %vm114, %v84, 0
  %v134 = vsel %vm114, %v85, 0
  %v137 = vsel %vm114, %v86, 0
  %vm139 = vcmask 1043456
  %v141 = vsel %vm139, %v109, 0
  %143 = vmatpush.bf16.msra.mxu0 0
  %144 = vmatpush.bf16.msra.mxu0 0
  %145 = vmatpush.bf16.msra.mxu0 0
  %146 = vmatpush.bf16.msra.mxu0 %v141
  %147 = vmatpush.bf16.msra.mxu0 %v108
  %148 = vmatpush.bf16.msra.mxu0 %v107
  %149 = vmatpush.bf16.msra.mxu0 %v106
  %150 = vmatpush.bf16.msra.mxu0 %v105
  %151 = vmatmul.bf16.gmra.mxu0 %v116
  %v152 = vpop.f32.mrf.mxu0
  %v153 = vadd.f32 %v45, %v152
  %v154 = vpop.f32.mrf.mxu0
  %v155 = vadd.f32 %v45, %v154
  %156 = vmatmul.bf16.gmra.mxu0 %v119
  %v157 = vpop.f32.mrf.mxu0
  %v158 = vadd.f32 %v45, %v157
  %v159 = vpop.f32.mrf.mxu0
  %v160 = vadd.f32 %v45, %v159
  %161 = vmatmul.bf16.gmra.mxu0 %v122
  %v162 = vpop.f32.mrf.mxu0
  %v163 = vadd.f32 %v45, %v162
  %v164 = vpop.f32.mrf.mxu0
  %v165 = vadd.f32 %v45, %v164
  %166 = vmatmul.bf16.gmra.mxu0 %v125
  %v167 = vpop.f32.mrf.mxu0
  %v168 = vadd.f32 %v45, %v167
  %v169 = vpop.f32.mrf.mxu0
  %v170 = vadd.f32 %v45, %v169
  %171 = vmatmul.bf16.gmra.mxu0 %v128
  %v172 = vpop.f32.mrf.mxu0
  %v173 = vadd.f32 %v45, %v172
  %v174 = vpop.f32.mrf.mxu0
  %v175 = vadd.f32 %v45, %v174
  %176 = vmatmul.bf16.gmra.mxu0 %v131
  %v177 = vpop.f32.mrf.mxu0
  %v178 = vadd.f32 %v45, %v177
  %v179 = vpop.f32.mrf.mxu0
  %v180 = vadd.f32 %v45, %v179
  %181 = vmatmul.bf16.gmra.mxu0 %v134
  %v182 = vpop.f32.mrf.mxu0
  %v183 = vadd.f32 %v45, %v182
  %v184 = vpop.f32.mrf.mxu0
  %v185 = vadd.f32 %v45, %v184
  %186 = vmatmul.bf16.gmra.mxu0 %v137
  %v187 = vpop.f32.mrf.mxu0
  %v188 = vadd.f32 %v45, %v187
  %v189 = vpop.f32.mrf.mxu0
  %v190 = vadd.f32 %v45, %v189
  %191 = vdwg.mxu0
  %v192 = vld [vmem:[%s3] sm:$0xff]
  %v193 = vld [vmem:[%s3 + $0x8] sm:$0xff]
  %v194 = vld [vmem:[%s3 + $0x10] sm:$0xff]
  %v195 = vld [vmem:[%s3 + $0x18] sm:$0xff]
  %v196 = vld [vmem:[%s3 + $0x20] sm:$0xff]
  %v197 = vld [vmem:[%s3 + $0x28] sm:$0xff]
  %v198 = vld [vmem:[%s3 + $0x30] sm:$0xff]
  %v199 = vld [vmem:[%s3 + $0x38] sm:$0xff]
  %v200 = vld [vmem:[%s3 + $0x40] sm:$0xff]
  %v201 = vld [vmem:[%s3 + $0x48] sm:$0xff]
  %v202 = vld [vmem:[%s3 + $0x50] sm:$0xff]
  %v203 = vld [vmem:[%s3 + $0x58] sm:$0xff]
  %v204 = vld [vmem:[%s3 + $0x60] sm:$0xff]
  %v205 = vld [vmem:[%s3 + $0x68] sm:$0xff]
  %v206 = vld [vmem:[%s3 + $0x70] sm:$0xff]
  %v207 = vld [vmem:[%s3 + $0x78] sm:$0xff]
  %v208 = vadd.f32 %v153, %v192
  %v209 = vadd.f32 %v155, %v193
  %v210 = vadd.f32 %v158, %v194
  %v211 = vadd.f32 %v160, %v195
  %v212 = vadd.f32 %v163, %v196
  %v213 = vadd.f32 %v165, %v197
  %v214 = vadd.f32 %v168, %v198
  %v215 = vadd.f32 %v170, %v199
  %v216 = vadd.f32 %v173, %v200
  %v217 = vadd.f32 %v175, %v201
  %v218 = vadd.f32 %v178, %v202
  %v219 = vadd.f32 %v180, %v203
  %v220 = vadd.f32 %v183, %v204
  %v221 = vadd.f32 %v185, %v205
  %v222 = vadd.f32 %v188, %v206
  %v223 = vadd.f32 %v190, %v207
  %v224 = vmax.f32 %v208, 0.0
  %v225 = vmax.f32 %v209, 0.0
  %v226 = vmax.f32 %v210, 0.0
  %v227 = vmax.f32 %v211, 0.0
  %v228 = vmax.f32 %v212, 0.0
  %v229 = vmax.f32 %v213, 0.0
  %v230 = vmax.f32 %v214, 0.0
  %v231 = vmax.f32 %v215, 0.0
  %v232 = vmax.f32 %v216, 0.0
  %v233 = vmax.f32 %v217, 0.0
  %v234 = vmax.f32 %v218, 0.0
  %v235 = vmax.f32 %v219, 0.0
  %v236 = vmax.f32 %v220, 0.0
  %v237 = vmax.f32 %v221, 0.0
  %v238 = vmax.f32 %v222, 0.0
  %v239 = vmax.f32 %v223, 0.0
  %240 = vst [vmem:[%s4] sm:$0xff] %v224
  %241 = vst [vmem:[%s4 + $0x8] sm:$0xff] %v225
  %242 = vst [vmem:[%s4 + $0x10] sm:$0xff] %v226
  %243 = vst [vmem:[%s4 + $0x18] sm:$0xff] %v227
  %244 = vst [vmem:[%s4 + $0x20] sm:$0xff] %v228
  %245 = vst [vmem:[%s4 + $0x28] sm:$0xff] %v229
  %246 = vst [vmem:[%s4 + $0x30] sm:$0xff] %v230
  %247 = vst [vmem:[%s4 + $0x38] sm:$0xff] %v231
  %248 = vst [vmem:[%s4 + $0x40] sm:$0xff] %v232
  %249 = vst [vmem:[%s4 + $0x48] sm:$0xff] %v233
  %250 = vst [vmem:[%s4 + $0x50] sm:$0xff] %v234
  %251 = vst [vmem:[%s4 + $0x58] sm:$0xff] %v235
  %252 = vst [vmem:[%s4 + $0x60] sm:$0xff] %v236
  %253 = vst [vmem:[%s4 + $0x68] sm:$0xff] %v237
  %254 = vst [vmem:[%s4 + $0x70] sm:$0xff] %v238
  %255 = vst [vmem:[%s4 + $0x78] sm:$0xff] %v239
  // Predicated region
  $region18: #{basic_block_forward.3} parent=0 // pred_check
    _
  $region19: #{basic_block_forward.3} parent=0 // pred_check_branch
    %257 = sbr.rel (0) target = $region21
  $region20: #{basic_block_forward.3} parent=0 // pred_region
    _
  $region21: #{basic_block_forward.3} parent=0 // pred_fallthru
    _
  // Predicated region
  $region22: #{basic_block_forward.3} parent=0 // pred_check
    _
  $region23: #{basic_block_forward.3} parent=0 // pred_check_branch
    %259 = sbr.rel (0) target = $region25
  $region24: #{basic_block_forward.3} parent=0 // pred_region
    _
  $region25: #{basic_block_forward.3} parent=0 // pred_fallthru
    _

</llo_original>
